<compile_context>
chip_gen: v7x
topology: tpu7x:2x2x1
jax: 0.10.0
libtpu: 0.0.40
codegen_flags: <defaults>
</compile_context>

<pallas_src>
import jax
import jax.numpy as jnp
from jax.experimental import pallas as pl
from jax.experimental.pallas import tpu as pltpu

HIDDEN = 128
OUT_PAD = 128          # lane-dense fc3 matmul width (only A columns stored)
LN_EPS = 1e-5


def _layernorm(h, gamma, beta):
    # Two-pass statistics (matches PyTorch LayerNorm; avoids cancellation).
    mean = jnp.mean(h, axis=-1, keepdims=True)
    d = h - mean
    var = jnp.mean(d * d, axis=-1, keepdims=True)
    return d * jax.lax.rsqrt(var + LN_EPS) * gamma + beta


def dqn_kernel(x_ref, w1_ref, w2_ref, w3_ref, vec_ref, o_ref):
    # Packed resident vectors: rows 0..5 = b1,g1,be1,b2,g2,be2 ; row 6 = b3 (padded).
    b1, g1, be1 = vec_ref[0:1, :], vec_ref[1:2, :], vec_ref[2:3, :]
    b2, g2, be2 = vec_ref[3:4, :], vec_ref[4:5, :], vec_ref[5:6, :]
    b3 = vec_ref[6:7, :]

    x = x_ref[...].astype(jnp.bfloat16)

    # fc1 -> LayerNorm -> ReLU   (dropout1 is identity in eval mode)
    h = jnp.dot(x, w1_ref[...], preferred_element_type=jnp.float32) + b1
    h = jnp.maximum(_layernorm(h, g1, be1), 0.0)
    # TODO(synk): dropout implemented as identity (inference/eval semantics);
    # a training path would need pltpu.prng_seed / prng_random_bits masking.

    # fc2 -> LayerNorm -> ReLU   (dropout2 is identity in eval mode)
    h = jnp.dot(h.astype(jnp.bfloat16), w2_ref[...],
                preferred_element_type=jnp.float32) + b2
    h = jnp.maximum(_layernorm(h, g2, be2), 0.0)

    # fc3: matmul at N=OUT_PAD (lane-dense on the MXU), store only the real
    # action_size columns -> HBM writeback is (TM, A), not (TM, 128).
    out = jnp.dot(h.astype(jnp.bfloat16), w3_ref[...],
                  preferred_element_type=jnp.float32) + b3
    o_ref[...] = out[:, : o_ref.shape[-1]].astype(o_ref.dtype)


def dqn_forward(x, params, *, tm=512):
    """Fused DQN forward. x: (B, state_size) f32. Returns (B, action_size) f32."""
    (w1, b1, g1, be1, w2, b2, g2, be2, w3, b3) = params
    B, S = x.shape
    A = w3.shape[1]
    assert A <= OUT_PAD and A <= HIDDEN

    # bf16 operands for the MXU; f32 accumulation via preferred_element_type.
    w1b = w1.astype(jnp.bfloat16)
    w2b = w2.astype(jnp.bfloat16)
    w3b = jnp.zeros((HIDDEN, OUT_PAD), jnp.bfloat16).at[:, :A].set(
        w3.astype(jnp.bfloat16))

    # Pack bias / LN vectors (+ padded fc3 bias) into one resident (8,128) tile.
    vecs = jnp.zeros((8, HIDDEN), jnp.float32)
    vecs = vecs.at[0].set(b1[0]).at[1].set(g1[0]).at[2].set(be1[0])
    vecs = vecs.at[3].set(b2[0]).at[4].set(g2[0]).at[5].set(be2[0])
    vecs = vecs.at[6, :A].set(b3[0])

    # Batch tile: multiple of 8 sublanes; capped so the grid has >=2 steps
    # whenever B allows it (lets the "parallel" axis use both v7x TCs).
    half = max(8, ((pl.cdiv(B, 2) + 7) // 8) * 8)
    TM = max(8, min(tm, half))
    grid = (pl.cdiv(B, TM),)   # non-divisible B: partial last block, no padding

    # Batch-tiled x / out; all parameters stay resident (same block every step).
    x_spec = pl.BlockSpec((TM, S), lambda i: (i, 0))
    w1_spec = pl.BlockSpec((S, HIDDEN), lambda i: (0, 0))
    w2_spec = pl.BlockSpec((HIDDEN, HIDDEN), lambda i: (0, 0))
    w3_spec = pl.BlockSpec((HIDDEN, OUT_PAD), lambda i: (0, 0))
    vec_spec = pl.BlockSpec((8, HIDDEN), lambda i: (0, 0))
    out_spec = pl.BlockSpec((TM, A), lambda i: (i, 0))  # last dim == full dim

    flops = 2 * B * (S * HIDDEN + HIDDEN * HIDDEN + HIDDEN * OUT_PAD)
    bytes_accessed = (4 * B * S + 4 * B * A
                      + 2 * (S * HIDDEN + HIDDEN * HIDDEN + HIDDEN * OUT_PAD)
                      + 4 * 8 * HIDDEN)
    cost = pl.CostEstimate(flops=flops,
                           transcendentals=2 * B,           # rsqrt per LN row
                           bytes_accessed=bytes_accessed)

    return pl.pallas_call(
        dqn_kernel,
        out_shape=jax.ShapeDtypeStruct((B, A), jnp.float32),
        grid=grid,
        in_specs=[x_spec, w1_spec, w2_spec, w3_spec, vec_spec],
        out_specs=out_spec,
        compiler_params=pltpu.CompilerParams(
            dimension_semantics=("parallel",)),   # megacore on v7x
        cost_estimate=cost,
    )(x, w1b, w2b, w3b, vecs)


def init_params(key, state_size, action_size):
    """Deterministic init matching the shapes of the PyTorch module."""
    ks = jax.random.split(key, 6)

    def linear(kw, kb, fan_in, fan_out):
        bound = 1.0 / jnp.sqrt(fan_in)
        w = jax.random.uniform(kw, (fan_in, fan_out), jnp.float32, -bound, bound)
        b = jax.random.uniform(kb, (1, fan_out), jnp.float32, -bound, bound)
        return w, b

    w1, b1 = linear(ks[0], ks[1], state_size, HIDDEN)
    w2, b2 = linear(ks[2], ks[3], HIDDEN, HIDDEN)
    w3, b3 = linear(ks[4], ks[5], HIDDEN, action_size)

    # LayerNorm affine params (PyTorch default: ones / zeros)
    g1 = jnp.ones((1, HIDDEN), jnp.float32)
    be1 = jnp.zeros((1, HIDDEN), jnp.float32)
    g2 = jnp.ones((1, HIDDEN), jnp.float32)
    be2 = jnp.zeros((1, HIDDEN), jnp.float32)

    return (w1, b1, g1, be1, w2, b2, g2, be2, w3, b3)


def dqn_reference(x, params):
    """Pure-JAX reference with the same bf16-multiply / f32-accumulate math."""
    (w1, b1, g1, be1, w2, b2, g2, be2, w3, b3) = params
    bf = jnp.bfloat16

    def ln(h, g, b):
        mean = jnp.mean(h, axis=-1, keepdims=True)
        var = jnp.mean((h - mean) ** 2, axis=-1, keepdims=True)
        return (h - mean) * jax.lax.rsqrt(var + LN_EPS) * g + b

    h = jnp.dot(x.astype(bf), w1.astype(bf),
                preferred_element_type=jnp.float32) + b1
    h = jnp.maximum(ln(h, g1, be1), 0.0)
    h = jnp.dot(h.astype(bf), w2.astype(bf),
                preferred_element_type=jnp.float32) + b2
    h = jnp.maximum(ln(h, g2, be2), 0.0)
    return jnp.dot(h.astype(bf), w3.astype(bf),
                   preferred_element_type=jnp.float32) + b3


if __name__ == "__main__":
    state_size = 16
    action_size = 4

    key = jax.random.PRNGKey(0)
    k_x, k_x2, k_p = jax.random.split(key, 3)
    params = init_params(k_p, state_size, action_size)

    # Small online-inference batch (single grid step, partial-free).
    batch = 8
    x = jax.random.normal(k_x, (batch, state_size), jnp.float32)
    out = jax.block_until_ready(dqn_forward(x, params))
    ref = dqn_reference(x, params)
    assert out.shape == (batch, action_size)
    assert jnp.allclose(out, ref, atol=1e-3, rtol=1e-3)

    # Larger, non-tile-aligned batch: exercises multi-step grid, the partial
    # last block (no host-side padding) and the narrow (TM, A) output store.
    batch2 = 200
    x2 = jax.random.normal(k_x2, (batch2, state_size), jnp.float32)
    out2 = jax.block_until_ready(dqn_forward(x2, params, tm=64))
    ref2 = dqn_reference(x2, params)
    assert out2.shape == (batch2, action_size)
    assert jnp.allclose(out2, ref2, atol=1e-3, rtol=1e-3)

    print("KERNEL_OK")
</pallas_src>

<mosaic_0001>
module attributes {stable_mosaic.version = 11 : i64} {
  func.func @dqn_kernel(%arg0: i32, %arg1: memref<8x16xf32, #tpu.memory_space<vmem>>, %arg2: memref<16x128xbf16, #tpu.memory_space<vmem>>, %arg3: memref<128x128xbf16, #tpu.memory_space<vmem>>, %arg4: memref<128x128xbf16, #tpu.memory_space<vmem>>, %arg5: memref<8x128xf32, #tpu.memory_space<vmem>>, %arg6: memref<8x4xf32, #tpu.memory_space<vmem>>) attributes {dimension_semantics = [#tpu.dimension_semantics<parallel>], iteration_bounds = array<i64: 1>, scalar_prefetch = 0 : i64, scratch_operands = 0 : i64, tpu.core_type = #tpu.core_type<tc>, window_params = [{transform_indices = @transform_0, window_bounds = array<i64: 8, 16>}, {pipeline_mode = #tpu.pipeline_mode<synchronous>, transform_indices = @transform_1, window_bounds = array<i64: 16, 128>}, {pipeline_mode = #tpu.pipeline_mode<synchronous>, transform_indices = @transform_2, window_bounds = array<i64: 128, 128>}, {pipeline_mode = #tpu.pipeline_mode<synchronous>, transform_indices = @transform_3, window_bounds = array<i64: 128, 128>}, {pipeline_mode = #tpu.pipeline_mode<synchronous>, transform_indices = @transform_4, window_bounds = array<i64: 8, 128>}, {transform_indices = @transform_5, window_bounds = array<i64: 8, 4>}]} {
    %c0 = arith.constant 0 : index
    %c0_0 = arith.constant 0 : index
    %0 = vector.load %arg5[%c0, %c0_0] : memref<8x128xf32, #tpu.memory_space<vmem>>, vector<1x128xf32>
    %c1 = arith.constant 1 : index
    %c0_1 = arith.constant 0 : index
    %1 = vector.load %arg5[%c1, %c0_1] : memref<8x128xf32, #tpu.memory_space<vmem>>, vector<1x128xf32>
    %c2 = arith.constant 2 : index
    %c0_2 = arith.constant 0 : index
    %2 = vector.load %arg5[%c2, %c0_2] : memref<8x128xf32, #tpu.memory_space<vmem>>, vector<1x128xf32>
    %c3 = arith.constant 3 : index
    %c0_3 = arith.constant 0 : index
    %3 = vector.load %arg5[%c3, %c0_3] : memref<8x128xf32, #tpu.memory_space<vmem>>, vector<1x128xf32>
    %c4 = arith.constant 4 : index
    %c0_4 = arith.constant 0 : index
    %4 = vector.load %arg5[%c4, %c0_4] : memref<8x128xf32, #tpu.memory_space<vmem>>, vector<1x128xf32>
    %c5 = arith.constant 5 : index
    %c0_5 = arith.constant 0 : index
    %5 = vector.load %arg5[%c5, %c0_5] : memref<8x128xf32, #tpu.memory_space<vmem>>, vector<1x128xf32>
    %c6 = arith.constant 6 : index
    %c0_6 = arith.constant 0 : index
    %6 = vector.load %arg5[%c6, %c0_6] : memref<8x128xf32, #tpu.memory_space<vmem>>, vector<1x128xf32>
    %c0_7 = arith.constant 0 : index
    %c0_8 = arith.constant 0 : index
    %7 = vector.load %arg1[%c0_7, %c0_8] : memref<8x16xf32, #tpu.memory_space<vmem>>, vector<8x16xf32>
    %8 = arith.truncf %7 : vector<8x16xf32> to vector<8x16xbf16>
    %c0_9 = arith.constant 0 : index
    %c0_10 = arith.constant 0 : index
    %9 = vector.load %arg2[%c0_9, %c0_10] : memref<16x128xbf16, #tpu.memory_space<vmem>>, vector<16x128xbf16>
    %cst = arith.constant dense<0.000000e+00> : vector<8x128xf32>
    %10 = tpu.matmul %8, %9, %cst {dimension_numbers = #tpu.dot_dimension_numbers<[1], [0], [0], [1], [0, 0, 1, 1], [], []>} : vector<8x16xbf16>, vector<16x128xbf16>, vector<8x128xf32> -> vector<8x128xf32>
    %11 = vector.broadcast %0 : vector<1x128xf32> to vector<8x128xf32>
    %12 = arith.addf %10, %11 : vector<8x128xf32>
    %cst_11 = arith.constant dense<0.000000e+00> : vector<8xf32>
    %13 = vector.multi_reduction <add>, %12, %cst_11 [1] : vector<8x128xf32> to vector<8xf32>
    %14 = vector.shape_cast %13 : vector<8xf32> to vector<8x1xf32>
    %cst_12 = arith.constant 1.280000e+02 : f32
    %15 = vector.broadcast %cst_12 : f32 to vector<8x1xf32>
    %16 = arith.divf %14, %15 : vector<8x1xf32>
    %17 = vector.broadcast %16 : vector<8x1xf32> to vector<8x128xf32>
    %18 = arith.subf %12, %17 : vector<8x128xf32>
    %19 = arith.mulf %18, %18 : vector<8x128xf32>
    %cst_13 = arith.constant dense<0.000000e+00> : vector<8xf32>
    %20 = vector.multi_reduction <add>, %19, %cst_13 [1] : vector<8x128xf32> to vector<8xf32>
    %21 = vector.shape_cast %20 : vector<8xf32> to vector<8x1xf32>
    %cst_14 = arith.constant 1.280000e+02 : f32
    %22 = vector.broadcast %cst_14 : f32 to vector<8x1xf32>
    %23 = arith.divf %21, %22 : vector<8x1xf32>
    %cst_15 = arith.constant 9.99999974E-6 : f32
    %24 = vector.broadcast %cst_15 : f32 to vector<8x1xf32>
    %25 = arith.addf %23, %24 : vector<8x1xf32>
    %26 = math.rsqrt %25 : vector<8x1xf32>
    %27 = vector.broadcast %26 : vector<8x1xf32> to vector<8x128xf32>
    %28 = arith.mulf %18, %27 : vector<8x128xf32>
    %29 = vector.broadcast %1 : vector<1x128xf32> to vector<8x128xf32>
    %30 = arith.mulf %28, %29 : vector<8x128xf32>
    %31 = vector.broadcast %2 : vector<1x128xf32> to vector<8x128xf32>
    %32 = arith.addf %30, %31 : vector<8x128xf32>
    %cst_16 = arith.constant 0.000000e+00 : f32
    %33 = vector.broadcast %cst_16 : f32 to vector<8x128xf32>
    %34 = arith.maximumf %32, %33 : vector<8x128xf32>
    %35 = arith.truncf %34 : vector<8x128xf32> to vector<8x128xbf16>
    %c0_17 = arith.constant 0 : index
    %c0_18 = arith.constant 0 : index
    %36 = vector.load %arg3[%c0_17, %c0_18] : memref<128x128xbf16, #tpu.memory_space<vmem>>, vector<128x128xbf16>
    %cst_19 = arith.constant dense<0.000000e+00> : vector<8x128xf32>
    %37 = tpu.matmul %35, %36, %cst_19 {dimension_numbers = #tpu.dot_dimension_numbers<[1], [0], [0], [1], [0, 0, 1, 1], [], []>} : vector<8x128xbf16>, vector<128x128xbf16>, vector<8x128xf32> -> vector<8x128xf32>
    %38 = vector.broadcast %3 : vector<1x128xf32> to vector<8x128xf32>
    %39 = arith.addf %37, %38 : vector<8x128xf32>
    %cst_20 = arith.constant dense<0.000000e+00> : vector<8xf32>
    %40 = vector.multi_reduction <add>, %39, %cst_20 [1] : vector<8x128xf32> to vector<8xf32>
    %41 = vector.shape_cast %40 : vector<8xf32> to vector<8x1xf32>
    %cst_21 = arith.constant 1.280000e+02 : f32
    %42 = vector.broadcast %cst_21 : f32 to vector<8x1xf32>
    %43 = arith.divf %41, %42 : vector<8x1xf32>
    %44 = vector.broadcast %43 : vector<8x1xf32> to vector<8x128xf32>
    %45 = arith.subf %39, %44 : vector<8x128xf32>
    %46 = arith.mulf %45, %45 : vector<8x128xf32>
    %cst_22 = arith.constant dense<0.000000e+00> : vector<8xf32>
    %47 = vector.multi_reduction <add>, %46, %cst_22 [1] : vector<8x128xf32> to vector<8xf32>
    %48 = vector.shape_cast %47 : vector<8xf32> to vector<8x1xf32>
    %cst_23 = arith.constant 1.280000e+02 : f32
    %49 = vector.broadcast %cst_23 : f32 to vector<8x1xf32>
    %50 = arith.divf %48, %49 : vector<8x1xf32>
    %cst_24 = arith.constant 9.99999974E-6 : f32
    %51 = vector.broadcast %cst_24 : f32 to vector<8x1xf32>
    %52 = arith.addf %50, %51 : vector<8x1xf32>
    %53 = math.rsqrt %52 : vector<8x1xf32>
    %54 = vector.broadcast %53 : vector<8x1xf32> to vector<8x128xf32>
    %55 = arith.mulf %45, %54 : vector<8x128xf32>
    %56 = vector.broadcast %4 : vector<1x128xf32> to vector<8x128xf32>
    %57 = arith.mulf %55, %56 : vector<8x128xf32>
    %58 = vector.broadcast %5 : vector<1x128xf32> to vector<8x128xf32>
    %59 = arith.addf %57, %58 : vector<8x128xf32>
    %cst_25 = arith.constant 0.000000e+00 : f32
    %60 = vector.broadcast %cst_25 : f32 to vector<8x128xf32>
    %61 = arith.maximumf %59, %60 : vector<8x128xf32>
    %62 = arith.truncf %61 : vector<8x128xf32> to vector<8x128xbf16>
    %c0_26 = arith.constant 0 : index
    %c0_27 = arith.constant 0 : index
    %63 = vector.load %arg4[%c0_26, %c0_27] : memref<128x128xbf16, #tpu.memory_space<vmem>>, vector<128x128xbf16>
    %cst_28 = arith.constant dense<0.000000e+00> : vector<8x128xf32>
    %64 = tpu.matmul %62, %63, %cst_28 {dimension_numbers = #tpu.dot_dimension_numbers<[1], [0], [0], [1], [0, 0, 1, 1], [], []>} : vector<8x128xbf16>, vector<128x128xbf16>, vector<8x128xf32> -> vector<8x128xf32>
    %65 = vector.broadcast %6 : vector<1x128xf32> to vector<8x128xf32>
    %66 = arith.addf %64, %65 : vector<8x128xf32>
    %67 = vector.extract_strided_slice %66 {offsets = [0, 0], sizes = [8, 4], strides = [1, 1]} : vector<8x128xf32> to vector<8x4xf32>
    %c0_29 = arith.constant 0 : index
    %c0_30 = arith.constant 0 : index
    %68 = vector.load %arg6[%c0_29, %c0_30] : memref<8x4xf32, #tpu.memory_space<vmem>>, vector<8x4xf32>
    tpu.vector_store %arg6[%c0_29, %c0_30], %67 {strides = array<i32>} : memref<8x4xf32, #tpu.memory_space<vmem>>, vector<8x4xf32>,
    return
  }
  func.func @transform_0(%arg0: i32) -> (i32, i32) {
    %c0_i32 = arith.constant 0 : i32
    %c0_i32_0 = arith.constant 0 : i32
    return %arg0, %c0_i32 : i32, i32
  }
  func.func @transform_1(%arg0: i32) -> (i32, i32) {
    %c0_i32 = arith.constant 0 : i32
    %c0_i32_0 = arith.constant 0 : i32
    %c0_i32_1 = arith.constant 0 : i32
    return %c0_i32, %c0_i32_0 : i32, i32
  }
  func.func @transform_2(%arg0: i32) -> (i32, i32) {
    %c0_i32 = arith.constant 0 : i32
    %c0_i32_0 = arith.constant 0 : i32
    %c0_i32_1 = arith.constant 0 : i32
    return %c0_i32, %c0_i32_0 : i32, i32
  }
  func.func @transform_3(%arg0: i32) -> (i32, i32) {
    %c0_i32 = arith.constant 0 : i32
    %c0_i32_0 = arith.constant 0 : i32
    %c0_i32_1 = arith.constant 0 : i32
    return %c0_i32, %c0_i32_0 : i32, i32
  }
  func.func @transform_4(%arg0: i32) -> (i32, i32) {
    %c0_i32 = arith.constant 0 : i32
    %c0_i32_0 = arith.constant 0 : i32
    %c0_i32_1 = arith.constant 0 : i32
    return %c0_i32, %c0_i32_0 : i32, i32
  }
  func.func @transform_5(%arg0: i32) -> (i32, i32) {
    %c0_i32 = arith.constant 0 : i32
    %c0_i32_0 = arith.constant 0 : i32
    return %arg0, %c0_i32 : i32, i32
  }
}

</mosaic_0001>

<llo_original>
// kernel: tpu_custom_call.1
$region0: #{tpu_custom_call.1}
  #allocation0 [shape = 'u32[]', space=smem, size = 0x4, offset = 0x4, fixed_abs, tag = 'smem constant byte address 0x4 - core index']
  #allocation1 [shape = 'u32[144,128]{1,0:T(1,128)}', space=vmem, size = 0x12000, scoped, tag = 'internal scratch']
  %s0 = inlined_call_operand.hbm [shape: f32[8,16], index: 0, kind: input, shape index: {}]
  %s1 = inlined_call_operand.hbm [shape: bf16[16,128], index: 1, kind: input, shape index: {}]
  %s2 = inlined_call_operand.hbm [shape: bf16[128,128], index: 2, kind: input, shape index: {}]
  %s3 = inlined_call_operand.hbm [shape: bf16[128,128], index: 3, kind: input, shape index: {}]
  %s4 = inlined_call_operand.vmem [shape: f32[8,128], index: 4, kind: input, shape index: {}]
  %s5 = inlined_call_operand.vmem [shape: f32[8,4], index: 5, kind: output, shape index: {}]
  %s6 = sld [smem:[#allocation0]]
  $region46: #{tpu_custom_call.1} parent=0
    _
  %s8 = ssub.s32 1, %s6
  %s9 = scalar_select 0, %s8, %s6
  $region1: #{tpu_custom_call.1} parent=0
    #allocation2 [shape = 'u8[4096]{0}', space=vmem, size = 0x1000, scoped, tag = 'input window, operand 0, single buffered']
    #allocation3 [shape = 's32[1]{0}', space=sflag, size = 0x4, scoped, tag = 'scoped memory for tpu_custom_call.1']
    #allocation4 [shape = 'u8[4096]{0}', space=vmem, size = 0x1000, scoped, tag = 'input window, operand 1, single buffered']
    #allocation5 [shape = 's32[1]{0}', space=sflag, size = 0x4, scoped, tag = 'scoped memory for tpu_custom_call.1']
    #allocation6 [shape = 'u8[32768]{0}', space=vmem, size = 0x8000, scoped, tag = 'input window, operand 2, single buffered']
    #allocation7 [shape = 'u8[32768]{0}', space=vmem, size = 0x8000, scoped, tag = 'input window, operand 3, single buffered']
    #allocation8 [shape = 's32[1]{0}', space=sflag, size = 0x4, scoped, tag = 'scoped memory for tpu_custom_call.1']
    %10 = vsyncpa [#allocation3], 0
    %11 = vsyncpa [#allocation5], 0
    %12 = vsyncpa [#allocation8], 0
    // Predicated region
    $region2: #{tpu_custom_call.1} parent=1 // pred_check
      _
    $region3: #{tpu_custom_call.1} parent=1 // pred_check_branch
      %14 = sbr.rel (0) target = $region5
    $region4: #{tpu_custom_call.1} parent=1 // pred_region
      %s16 = ssub.s32 128, 128
      %17 = vsyncadd [#allocation3], %s16
      %s19 = sshll.u32 [#allocation2], 4
      %s20 = int_to_ptr.vmem [resolvable:$true] %s19
      %22 = dma.hbm_to_vmem [thread:$0]  %s0, 128, %s20, [#allocation3]
    $region5: #{tpu_custom_call.1} parent=1 // pred_fallthru
      _
    // Predicated region
    $region6: #{tpu_custom_call.1} parent=1 // pred_check
      _
    $region7: #{tpu_custom_call.1} parent=1 // pred_check_branch
      %24 = sbr.rel (0) target = $region9
    $region8: #{tpu_custom_call.1} parent=1 // pred_region
      %s26 = ssub.s32 128, 128
      %27 = vsyncadd [#allocation5], %s26
      %s28 = sshll.u32 [#allocation4], 4
      %s29 = int_to_ptr.vmem [resolvable:$true] %s28
      %34 = dma.hbm_to_vmem [thread:$0]  %s1, 128, %s29, [#allocation5], 64, 64, 4
    $region9: #{tpu_custom_call.1} parent=1 // pred_fallthru
      _
    // Predicated region
    $region10: #{tpu_custom_call.1} parent=1 // pred_check
      _
    $region11: #{tpu_custom_call.1} parent=1 // pred_check_branch
      %36 = sbr.rel (0) target = $region13
    $region12: #{tpu_custom_call.1} parent=1 // pred_region
      %s38 = ssub.s32 1024, 1024
      %39 = vsyncadd [#allocation5], %s38
      %s40 = sshll.u32 [#allocation6], 4
      %s41 = int_to_ptr.vmem [resolvable:$true] %s40
      %46 = dma.hbm_to_vmem [thread:$0]  %s2, 1024, %s41, [#allocation5], 64, 64, 4
    $region13: #{tpu_custom_call.1} parent=1 // pred_fallthru
      _
    // Predicated region
    $region14: #{tpu_custom_call.1} parent=1 // pred_check
      _
    $region15: #{tpu_custom_call.1} parent=1 // pred_check_branch
      %48 = sbr.rel (0) target = $region17
    $region16: #{tpu_custom_call.1} parent=1 // pred_region
      %s50 = ssub.s32 1024, 1024
      %51 = vsyncadd [#allocation8], %s50
      %s52 = sshll.u32 [#allocation7], 4
      %s53 = int_to_ptr.vmem [resolvable:$true] %s52
      %58 = dma.hbm_to_vmem [thread:$0]  %s3, 1024, %s53, [#allocation8], 64, 64, 4
    $region17: #{tpu_custom_call.1} parent=1 // pred_fallthru
      _
    // Predicated region
    $region18: #{tpu_custom_call.1} parent=1 // pred_check
      _
    $region19: #{tpu_custom_call.1} parent=1 // pred_check_branch
      %60 = sbr.rel (0) target = $region21
    $region20: #{tpu_custom_call.1} parent=1 // pred_region
      _
    $region21: #{tpu_custom_call.1} parent=1 // pred_fallthru
      _
    // Predicated region
    $region22: #{tpu_custom_call.1} parent=1 // pred_check
      _
    $region23: #{tpu_custom_call.1} parent=1 // pred_check_branch
      %62 = sbr.rel (0) target = $region25
    $region24: #{tpu_custom_call.1} parent=1 // pred_region
      %63 = dma.done [#allocation3], 128
    $region25: #{tpu_custom_call.1} parent=1 // pred_fallthru
      _
    // Predicated region
    $region26: #{tpu_custom_call.1} parent=1 // pred_check
      _
    $region27: #{tpu_custom_call.1} parent=1 // pred_check_branch
      %65 = sbr.rel (0) target = $region29
    $region28: #{tpu_custom_call.1} parent=1 // pred_region
      %66 = dma.done [#allocation5], 128
    $region29: #{tpu_custom_call.1} parent=1 // pred_fallthru
      _
    // Predicated region
    $region30: #{tpu_custom_call.1} parent=1 // pred_check
      _
    $region31: #{tpu_custom_call.1} parent=1 // pred_check_branch
      %68 = sbr.rel (0) target = $region33
    $region32: #{tpu_custom_call.1} parent=1 // pred_region
      %69 = dma.done [#allocation5], 1024
    $region33: #{tpu_custom_call.1} parent=1 // pred_fallthru
      _
    // Predicated region
    $region34: #{tpu_custom_call.1} parent=1 // pred_check
      _
    $region35: #{tpu_custom_call.1} parent=1 // pred_check_branch
      %71 = sbr.rel (0) target = $region37
    $region36: #{tpu_custom_call.1} parent=1 // pred_region
      %72 = dma.done [#allocation8], 1024
    $region37: #{tpu_custom_call.1} parent=1 // pred_fallthru
      _
    %v74 = vld [vmem:[%s4] sm:$0x1]
    %v75 = vld [vmem:[%s4 + $0x1] sm:$0x1]
    %v76 = vld [vmem:[%s4 + $0x2] sm:$0x1]
    %v77 = vld [vmem:[%s4 + $0x3] sm:$0x1]
    %v78 = vld [vmem:[%s4 + $0x4] sm:$0x1]
    %v79 = vld [vmem:[%s4 + $0x5] sm:$0x1]
    %v80 = vld [vmem:[%s4 + $0x6] sm:$0x1]
    %v81 = vld [vmem:[#allocation2] sm:$0xff]
    %v82 = vpack.c.bf16 %v81, %v81
    %v83 = vld [vmem:[#allocation4] sm:$0xf]
    %v84 = vld [vmem:[#allocation4 + $0x4] sm:$0xf]
    %v85 = vlaneseq
    %v86 = vshrl.u32 %v85, 7
    %v87 = vsub.s32 0, %v86
    %v88 = vrot.slane %v74, %v87
    %v91 = vunpack.c.l.b16 %v83
    %v92 = vunpack.c.l.b16 %v84
    %v93 = vpack.c.b16 %v92, %v91
    %vm95 = vcmask 130048
    %v97 = vsel %vm95, %v82, 0
    %99 = vmatprep.subr.bf16.mxu0 0
    %100 = vmatpush1.bf16.msra.mxu0 %v93
    %101 = vmatprep.subr.bf16.mxu0 0
    %102 = vmatpush1.bf16.msra.mxu0 0
    %103 = vmatprep.subr.bf16.mxu0 0
    %104 = vmatpush1.bf16.msra.mxu0 0
    %105 = vmatprep.subr.bf16.mxu0 0
    %106 = vmatpush1.bf16.msra.mxu0 0
    %107 = vmatprep.subr.bf16.mxu0 0
    %108 = vmatpush1.bf16.msra.mxu0 0
    %109 = vmatprep.subr.bf16.mxu0 0
    %110 = vmatpush1.bf16.msra.mxu0 0
    %111 = vmatprep.subr.bf16.mxu0 0
    %112 = vmatpush1.bf16.msra.mxu0 0
    %113 = vmatprep.subr.bf16.mxu0 0
    %114 = vmatpush1.bf16.msra.mxu0 0
    %115 = vmatprep.subr.bf16.mxu0 0
    %116 = vmatpush1.bf16.msra.mxu0 0
    %117 = vmatprep.subr.bf16.mxu0 0
    %118 = vmatpush1.bf16.msra.mxu0 0
    %119 = vmatprep.subr.bf16.mxu0 0
    %120 = vmatpush1.bf16.msra.mxu0 0
    %121 = vmatprep.subr.bf16.mxu0 0
    %122 = vmatpush1.bf16.msra.mxu0 0
    %123 = vmatprep.subr.bf16.mxu0 0
    %124 = vmatpush1.bf16.msra.mxu0 0
    %125 = vmatprep.subr.bf16.mxu0 0
    %126 = vmatpush1.bf16.msra.mxu0 0
    %127 = vmatprep.subr.bf16.mxu0 0
    %128 = vmatpush1.bf16.msra.mxu0 0
    %129 = vmatprep.subr.bf16.mxu0 0
    %130 = vmatpush1.bf16.msra.mxu0 0
    %131 = vmatprep.mubr.bf16.mxu0 0
    %132 = vmatmul.mubr.bf16.gmra.mrb[0].mxu0 %v97
    %v133 = vpop.f32.mrb[0].mxu0
    %v134 = vadd.f32 %v88, %v133
    %v135 = vpop.f32.mrb[0].mxu0
    %v136 = vpop.f32.mrb[0].mxu0
    %v137 = vpop.f32.mrb[0].mxu0
    %138 = vdwg.mxu0
    %139 = vadd.xlane.f32.xlu0 %v134
    %v140 = vpop.xlane.xlu0 %139
    %v141 = vrcp.pop 128.0
    %v142 = vmul.f32 %v140, %v141
    %v143 = vsub.f32 %v134, %v142
    %v144 = vmul.f32 %v143, %v143
    %145 = vadd.xlane.f32.xlu0 %v144
    %v146 = vpop.xlane.xlu0 %145
    %v147 = vmul.f32 %v146, %v141
    %v148 = vadd.f32 %v147, 1e-05
    %v149 = vrsqrt.pop %v148
    %v150 = vmul.f32 %v143, %v149
    %v151 = vlaneseq
    %v152 = vshrl.u32 %v151, 7
    %v153 = vsub.s32 0, %v152
    %v154 = vrot.slane %v75, %v153
    %v155 = vmul.f32 %v150, %v154
    %v156 = vlaneseq
    %v157 = vshrl.u32 %v156, 7
    %v158 = vsub.s32 0, %v157
    %v159 = vrot.slane %v76, %v158
    %v160 = vadd.f32 %v155, %v159
    %v161 = vmax.f32 %v160, 0.0
    %v162 = vpack.c.bf16 %v161, %v161
    %v163 = vld [vmem:[#allocation6] sm:$0xf]
    %v164 = vld [vmem:[#allocation6 + $0x4] sm:$0xf]
    %v165 = vld [vmem:[#allocation6 + $0x8] sm:$0xf]
    %v166 = vld [vmem:[#allocation6 + $0xc] sm:$0xf]
    %v167 = vld [vmem:[#allocation6 + $0x10] sm:$0xf]
    %v168 = vld [vmem:[#allocation6 + $0x14] sm:$0xf]
    %v169 = vld [vmem:[#allocation6 + $0x18] sm:$0xf]
    %v170 = vld [vmem:[#allocation6 + $0x1c] sm:$0xf]
    %v171 = vld [vmem:[#allocation6 + $0x20] sm:$0xf]
    %v172 = vld [vmem:[#allocation6 + $0x24] sm:$0xf]
    %v173 = vld [vmem:[#allocation6 + $0x28] sm:$0xf]
    %v174 = vld [vmem:[#allocation6 + $0x2c] sm:$0xf]
    %v175 = vld [vmem:[#allocation6 + $0x30] sm:$0xf]
    %v176 = vld [vmem:[#allocation6 + $0x34] sm:$0xf]
    %v177 = vld [vmem:[#allocation6 + $0x38] sm:$0xf]
    %v178 = vld [vmem:[#allocation6 + $0x3c] sm:$0xf]
    %v179 = vlaneseq
    %v180 = vshrl.u32 %v179, 7
    %v181 = vsub.s32 0, %v180
    %v182 = vrot.slane %v77, %v181
    %v199 = vunpack.c.l.b16 %v163
    %v200 = vunpack.c.l.b16 %v164
    %v201 = vunpack.c.l.b16 %v165
    %v202 = vunpack.c.l.b16 %v166
    %v203 = vunpack.c.l.b16 %v167
    %v204 = vunpack.c.l.b16 %v168
    %v205 = vunpack.c.l.b16 %v169
    %v206 = vunpack.c.l.b16 %v170
    %v207 = vunpack.c.l.b16 %v171
    %v208 = vunpack.c.l.b16 %v172
    %v209 = vunpack.c.l.b16 %v173
    %v210 = vunpack.c.l.b16 %v174
    %v211 = vunpack.c.l.b16 %v175
    %v212 = vunpack.c.l.b16 %v176
    %v213 = vunpack.c.l.b16 %v177
    %v214 = vunpack.c.l.b16 %v178
    %v215 = vpack.c.b16 %v200, %v199
    %v216 = vpack.c.b16 %v202, %v201
    %v217 = vpack.c.b16 %v204, %v203
    %v218 = vpack.c.b16 %v206, %v205
    %v219 = vpack.c.b16 %v208, %v207
    %v220 = vpack.c.b16 %v210, %v209
    %v221 = vpack.c.b16 %v212, %v211
    %v222 = vpack.c.b16 %v214, %v213
    %231 = vmatprep.subr.bf16.mxu0 0
    %232 = vmatpush1.bf16.msra.mxu0 %v215
    %233 = vmatprep.subr.bf16.mxu0 0
    %234 = vmatpush1.bf16.msra.mxu0 %v216
    %235 = vmatprep.subr.bf16.mxu0 0
    %236 = vmatpush1.bf16.msra.mxu0 %v217
    %237 = vmatprep.subr.bf16.mxu0 0
    %238 = vmatpush1.bf16.msra.mxu0 %v218
    %239 = vmatprep.subr.bf16.mxu0 0
    %240 = vmatpush1.bf16.msra.mxu0 %v219
    %241 = vmatprep.subr.bf16.mxu0 0
    %242 = vmatpush1.bf16.msra.mxu0 %v220
    %243 = vmatprep.subr.bf16.mxu0 0
    %244 = vmatpush1.bf16.msra.mxu0 %v221
    %245 = vmatprep.subr.bf16.mxu0 0
    %246 = vmatpush1.bf16.msra.mxu0 %v222
    %247 = vmatprep.subr.bf16.mxu0 0
    %248 = vmatpush1.bf16.msra.mxu0 0
    %249 = vmatprep.subr.bf16.mxu0 0
    %250 = vmatpush1.bf16.msra.mxu0 0
    %251 = vmatprep.subr.bf16.mxu0 0
    %252 = vmatpush1.bf16.msra.mxu0 0
    %253 = vmatprep.subr.bf16.mxu0 0
    %254 = vmatpush1.bf16.msra.mxu0 0
    %255 = vmatprep.subr.bf16.mxu0 0
    %256 = vmatpush1.bf16.msra.mxu0 0
    %257 = vmatprep.subr.bf16.mxu0 0
    %258 = vmatpush1.bf16.msra.mxu0 0
    %259 = vmatprep.subr.bf16.mxu0 0
    %260 = vmatpush1.bf16.msra.mxu0 0
    %261 = vmatprep.subr.bf16.mxu0 0
    %262 = vmatpush1.bf16.msra.mxu0 0
    %263 = vmatprep.mubr.bf16.mxu0 0
    %264 = vmatmul.mubr.bf16.gmra.mrb[0].mxu0 %v162
    %v265 = vpop.f32.mrb[0].mxu0
    %v266 = vadd.f32 %v182, %v265
    %v267 = vpop.f32.mrb[0].mxu0
    %v268 = vpop.f32.mrb[0].mxu0
    %v269 = vpop.f32.mrb[0].mxu0
    %270 = vdwg.mxu0
    %271 = vadd.xlane.f32.xlu0 %v266
    %v272 = vpop.xlane.xlu0 %271
    %v273 = vmul.f32 %v272, %v141
    %v274 = vsub.f32 %v266, %v273
    %v275 = vmul.f32 %v274, %v274
    %276 = vadd.xlane.f32.xlu0 %v275
    %v277 = vpop.xlane.xlu0 %276
    %v278 = vmul.f32 %v277, %v141
    %v279 = vadd.f32 %v278, 1e-05
    %v280 = vrsqrt.pop %v279
    %v281 = vmul.f32 %v274, %v280
    %v282 = vlaneseq
    %v283 = vshrl.u32 %v282, 7
    %v284 = vsub.s32 0, %v283
    %v285 = vrot.slane %v78, %v284
    %v286 = vmul.f32 %v281, %v285
    %v287 = vlaneseq
    %v288 = vshrl.u32 %v287, 7
    %v289 = vsub.s32 0, %v288
    %v290 = vrot.slane %v79, %v289
    %v291 = vadd.f32 %v286, %v290
    %v292 = vmax.f32 %v291, 0.0
    %v293 = vpack.c.bf16 %v292, %v292
    %v294 = vld [vmem:[#allocation7] sm:$0xf]
    %v295 = vld [vmem:[#allocation7 + $0x4] sm:$0xf]
    %v296 = vld [vmem:[#allocation7 + $0x8] sm:$0xf]
    %v297 = vld [vmem:[#allocation7 + $0xc] sm:$0xf]
    %v298 = vld [vmem:[#allocation7 + $0x10] sm:$0xf]
    %v299 = vld [vmem:[#allocation7 + $0x14] sm:$0xf]
    %v300 = vld [vmem:[#allocation7 + $0x18] sm:$0xf]
    %v301 = vld [vmem:[#allocation7 + $0x1c] sm:$0xf]
    %v302 = vld [vmem:[#allocation7 + $0x20] sm:$0xf]
    %v303 = vld [vmem:[#allocation7 + $0x24] sm:$0xf]
    %v304 = vld [vmem:[#allocation7 + $0x28] sm:$0xf]
    %v305 = vld [vmem:[#allocation7 + $0x2c] sm:$0xf]
    %v306 = vld [vmem:[#allocation7 + $0x30] sm:$0xf]
    %v307 = vld [vmem:[#allocation7 + $0x34] sm:$0xf]
    %v308 = vld [vmem:[#allocation7 + $0x38] sm:$0xf]
    %v309 = vld [vmem:[#allocation7 + $0x3c] sm:$0xf]
    %v310 = vlaneseq
    %v311 = vshrl.u32 %v310, 7
    %v312 = vsub.s32 0, %v311
    %v313 = vrot.slane %v80, %v312
    %v330 = vunpack.c.l.b16 %v294
    %v331 = vunpack.c.l.b16 %v295
    %v332 = vunpack.c.l.b16 %v296
    %v333 = vunpack.c.l.b16 %v297
    %v334 = vunpack.c.l.b16 %v298
    %v335 = vunpack.c.l.b16 %v299
    %v336 = vunpack.c.l.b16 %v300
    %v337 = vunpack.c.l.b16 %v301
    %v338 = vunpack.c.l.b16 %v302
    %v339 = vunpack.c.l.b16 %v303
    %v340 = vunpack.c.l.b16 %v304
    %v341 = vunpack.c.l.b16 %v305
    %v342 = vunpack.c.l.b16 %v306
    %v343 = vunpack.c.l.b16 %v307
    %v344 = vunpack.c.l.b16 %v308
    %v345 = vunpack.c.l.b16 %v309
    %v346 = vpack.c.b16 %v331, %v330
    %v347 = vpack.c.b16 %v333, %v332
    %v348 = vpack.c.b16 %v335, %v334
    %v349 = vpack.c.b16 %v337, %v336
    %v350 = vpack.c.b16 %v339, %v338
    %v351 = vpack.c.b16 %v341, %v340
    %v352 = vpack.c.b16 %v343, %v342
    %v353 = vpack.c.b16 %v345, %v344
    %362 = vmatprep.subr.bf16.mxu0 0
    %363 = vmatpush1.bf16.msra.mxu0 %v346
    %364 = vmatprep.subr.bf16.mxu0 0
    %365 = vmatpush1.bf16.msra.mxu0 %v347
    %366 = vmatprep.subr.bf16.mxu0 0
    %367 = vmatpush1.bf16.msra.mxu0 %v348
    %368 = vmatprep.subr.bf16.mxu0 0
    %369 = vmatpush1.bf16.msra.mxu0 %v349
    %370 = vmatprep.subr.bf16.mxu0 0
    %371 = vmatpush1.bf16.msra.mxu0 %v350
    %372 = vmatprep.subr.bf16.mxu0 0
    %373 = vmatpush1.bf16.msra.mxu0 %v351
    %374 = vmatprep.subr.bf16.mxu0 0
    %375 = vmatpush1.bf16.msra.mxu0 %v352
    %376 = vmatprep.subr.bf16.mxu0 0
    %377 = vmatpush1.bf16.msra.mxu0 %v353
    %378 = vmatprep.subr.bf16.mxu0 0
    %379 = vmatpush1.bf16.msra.mxu0 0
    %380 = vmatprep.subr.bf16.mxu0 0
    %381 = vmatpush1.bf16.msra.mxu0 0
    %382 = vmatprep.subr.bf16.mxu0 0
    %383 = vmatpush1.bf16.msra.mxu0 0
    %384 = vmatprep.subr.bf16.mxu0 0
    %385 = vmatpush1.bf16.msra.mxu0 0
    %386 = vmatprep.subr.bf16.mxu0 0
    %387 = vmatpush1.bf16.msra.mxu0 0
    %388 = vmatprep.subr.bf16.mxu0 0
    %389 = vmatpush1.bf16.msra.mxu0 0
    %390 = vmatprep.subr.bf16.mxu0 0
    %391 = vmatpush1.bf16.msra.mxu0 0
    %392 = vmatprep.subr.bf16.mxu0 0
    %393 = vmatpush1.bf16.msra.mxu0 0
    %394 = vmatprep.mubr.bf16.mxu0 0
    %395 = vmatmul.mubr.bf16.gmra.mrb[0].mxu0 %v293
    %v396 = vpop.f32.mrb[0].mxu0
    %v397 = vadd.f32 %v313, %v396
    %v398 = vpop.f32.mrb[0].mxu0
    %v399 = vpop.f32.mrb[0].mxu0
    %v400 = vpop.f32.mrb[0].mxu0
    %401 = vdwg.mxu0
    %vm402 = vcmask 31744
    %403 = vst.msk [vmem:[%s5] sm:$0xff] %vm402, %v397
    // Predicated region
    $region38: #{tpu_custom_call.1} parent=1 // pred_check
      _
    $region39: #{tpu_custom_call.1} parent=1 // pred_check_branch
      %405 = sbr.rel (0) target = $region41
    $region40: #{tpu_custom_call.1} parent=1 // pred_region
      _
    $region41: #{tpu_custom_call.1} parent=1 // pred_fallthru
      _
    // Predicated region
    $region42: #{tpu_custom_call.1} parent=1 // pred_check
      _
    $region43: #{tpu_custom_call.1} parent=1 // pred_check_branch
      %407 = sbr.rel (0) target = $region45
    $region44: #{tpu_custom_call.1} parent=1 // pred_region
      _
    $region45: #{tpu_custom_call.1} parent=1 // pred_fallthru
      _
    %408 = vsyncpa [#allocation3], 1
    %409 = vsyncpa [#allocation5], 1
    %410 = vsyncpa [#allocation8], 1

</llo_original>
